<compile_context>
chip_gen: v7x
topology: tpu7x:2x2x1
jax: 0.10.0
libtpu: 0.0.40
codegen_flags: <defaults>
</compile_context>

<pallas_src>
import functools

import jax
import jax.numpy as jnp
from jax.experimental import pallas as pl
from jax.experimental.pallas import tpu as pltpu  # noqa: F401  (TPU backend)


def vanilla_gnn_kernel(x_ref, a_ref, w1_ref, b1_ref, w2_ref, b2_ref,
                       wo_ref, bo_ref, out_ref):
    # x_ref : [B*N, Din]    batch-flattened node features
    # a_ref : [B*N, B*N]    block-diagonal normalized adjacency kron(I_B, A_hat)
    # wo_ref/bo_ref         lane-padded output projection ([H, 128k], [1, 128k])
    # out_ref : [B, 128k]   lane-dense pooled output (sliced to Dout outside)
    BN = x_ref.shape[0]
    B = out_ref.shape[0]
    N = BN // B                                   # static python ints

    a_bd = a_ref[...]                             # [B*N, B*N]

    # ---- GCN layer 1, reordered: (A_bd @ x) @ W1  (exact by associativity;
    #      Din <= H so the N^2 term is done on the narrow operand) -------------
    ax = jnp.dot(a_bd, x_ref[...], preferred_element_type=jnp.float32)   # [B*N, Din]
    h = jnp.dot(ax, w1_ref[...], preferred_element_type=jnp.float32)     # [B*N, H]
    h = jnp.maximum(h + b1_ref[...], 0.0)

    # ---- GCN layer 2: A_bd @ (h @ W2) + b2, relu ------------------------------
    hw = jnp.dot(h, w2_ref[...], preferred_element_type=jnp.float32)     # [B*N, H]
    h = jnp.dot(a_bd, hw, preferred_element_type=jnp.float32)            # [B*N, H]
    h = jnp.maximum(h + b2_ref[...], 0.0)

    # ---- Output Linear (lane-padded) + relu -----------------------------------
    proj = jnp.dot(h, wo_ref[...], preferred_element_type=jnp.float32)   # [B*N, DoutP]
    proj = jnp.maximum(proj + bo_ref[...], 0.0)

    # ---- global_mean_pool over the N node axis (sublane reduction, no matmul) -
    pooled = proj.reshape(B, N, proj.shape[-1]).sum(axis=1) * (1.0 / N)  # [B, DoutP]
    out_ref[...] = pooled


@functools.partial(jax.jit, static_argnames=())
def vanilla_gnn_forward(x, a_hat, w1, b1, w2, b2, wo, bo):
    B, N, Din = x.shape
    H = w1.shape[1]
    Dout = wo.shape[1]
    dout_p = ((Dout + 127) // 128) * 128          # lane-dense output width

    # Wrapper-side layout plumbing (cheap XLA ops, fused under jit):
    x_flat = x.reshape(B * N, Din)
    a_bd = jnp.kron(jnp.eye(B, dtype=jnp.float32), a_hat)   # [B*N, B*N] block-diag
    wo_p = jnp.zeros((H, dout_p), jnp.float32).at[:, :Dout].set(wo)
    bo_p = jnp.zeros((1, dout_p), jnp.float32).at[:, :Dout].set(bo)

    out_p = pl.pallas_call(
        vanilla_gnn_kernel,
        out_shape=jax.ShapeDtypeStruct((B, dout_p), jnp.float32),
    )(x_flat, a_bd, w1, b1, w2, b2, wo_p, bo_p)

    return out_p[:, :Dout].reshape(B, 1, Dout)


def build_normalized_adjacency(edge_index, num_nodes):
    """Dense A_hat = D^{-1/2} (A + I) D^{-1/2}, matching PyG GCNConv defaults."""
    src, dst = edge_index[0], edge_index[1]
    a = jnp.zeros((num_nodes, num_nodes), jnp.float32)
    a = a.at[dst, src].set(1.0)                       # message j -> i lands in row i
    a = a + jnp.eye(num_nodes, dtype=jnp.float32)     # self loops
    deg = a.sum(axis=1)
    dinv = jnp.where(deg > 0, 1.0 / jnp.sqrt(deg), 0.0)
    return a * dinv[:, None] * dinv[None, :]


def reference_forward(x, a_hat, w1, b1, w2, b2, wo, bo):
    h = jnp.maximum(jnp.einsum("nm,bmh->bnh", a_hat, x @ w1) + b1, 0.0)
    h = jnp.maximum(jnp.einsum("nm,bmh->bnh", a_hat, h @ w2) + b2, 0.0)
    h = jnp.maximum(h @ wo + bo, 0.0)
    return jnp.mean(h, axis=1, keepdims=True)


if __name__ == "__main__":
    B, N, Din, H, Dout = 2, 8, 4, 32, 1

    key = jax.random.PRNGKey(0)
    ks = jax.random.split(key, 7)

    x = jax.random.normal(ks[0], (B, N, Din), dtype=jnp.float32)

    # Deterministic small graph: undirected ring on N nodes.
    src = jnp.arange(N, dtype=jnp.int32)
    dst = (src + 1) % N
    edge_index = jnp.stack([jnp.concatenate([src, dst]),
                            jnp.concatenate([dst, src])])
    a_hat = build_normalized_adjacency(edge_index, N)

    # Deterministic parameter init (synthetic; matches module shapes).
    w1 = jax.random.normal(ks[1], (Din, H), dtype=jnp.float32) * 0.2
    b1 = jax.random.normal(ks[2], (1, H), dtype=jnp.float32) * 0.1
    w2 = jax.random.normal(ks[3], (H, H), dtype=jnp.float32) * 0.1
    b2 = jax.random.normal(ks[4], (1, H), dtype=jnp.float32) * 0.1
    wo = jax.random.normal(ks[5], (H, Dout), dtype=jnp.float32) * 0.1
    bo = jax.random.normal(ks[6], (1, Dout), dtype=jnp.float32) * 0.1

    out = vanilla_gnn_forward(x, a_hat, w1, b1, w2, b2, wo, bo)
    jax.block_until_ready(out)

    ref = reference_forward(x, a_hat, w1, b1, w2, b2, wo, bo)
    assert out.shape == (B, 1, Dout)
    assert jnp.allclose(out, ref, atol=1e-5, rtol=1e-5)

    print("KERNEL_OK")
</pallas_src>

<mosaic_0001>
module attributes {stable_mosaic.version = 11 : i64} {
  func.func @vanilla_gnn_kernel(%arg0: memref<16x4xf32, #tpu.memory_space<vmem>>, %arg1: memref<16x16xf32, #tpu.memory_space<vmem>>, %arg2: memref<4x32xf32, #tpu.memory_space<vmem>>, %arg3: memref<1x32xf32, #tpu.memory_space<vmem>>, %arg4: memref<32x32xf32, #tpu.memory_space<vmem>>, %arg5: memref<1x32xf32, #tpu.memory_space<vmem>>, %arg6: memref<32x128xf32, #tpu.memory_space<vmem>>, %arg7: memref<1x128xf32, #tpu.memory_space<vmem>>, %arg8: memref<2x128xf32, #tpu.memory_space<vmem>>) attributes {dimension_semantics = [], scalar_prefetch = 0 : i64, scratch_operands = 0 : i64, tpu.core_type = #tpu.core_type<tc>} {
    %c0 = arith.constant 0 : index
    %c0_0 = arith.constant 0 : index
    %0 = vector.load %arg1[%c0, %c0_0] : memref<16x16xf32, #tpu.memory_space<vmem>>, vector<16x16xf32>
    %c0_1 = arith.constant 0 : index
    %c0_2 = arith.constant 0 : index
    %1 = vector.load %arg0[%c0_1, %c0_2] : memref<16x4xf32, #tpu.memory_space<vmem>>, vector<16x4xf32>
    %cst = arith.constant dense<0.000000e+00> : vector<16x4xf32>
    %2 = tpu.matmul %0, %1, %cst {dimension_numbers = #tpu.dot_dimension_numbers<[1], [0], [0], [1], [0, 0, 1, 1], [], []>} : vector<16x16xf32>, vector<16x4xf32>, vector<16x4xf32> -> vector<16x4xf32>
    %c0_3 = arith.constant 0 : index
    %c0_4 = arith.constant 0 : index
    %3 = vector.load %arg2[%c0_3, %c0_4] : memref<4x32xf32, #tpu.memory_space<vmem>>, vector<4x32xf32>
    %cst_5 = arith.constant dense<0.000000e+00> : vector<16x32xf32>
    %4 = tpu.matmul %2, %3, %cst_5 {dimension_numbers = #tpu.dot_dimension_numbers<[1], [0], [0], [1], [0, 0, 1, 1], [], []>} : vector<16x4xf32>, vector<4x32xf32>, vector<16x32xf32> -> vector<16x32xf32>
    %c0_6 = arith.constant 0 : index
    %c0_7 = arith.constant 0 : index
    %5 = vector.load %arg3[%c0_6, %c0_7] : memref<1x32xf32, #tpu.memory_space<vmem>>, vector<1x32xf32>
    %6 = vector.broadcast %5 : vector<1x32xf32> to vector<16x32xf32>
    %7 = arith.addf %4, %6 : vector<16x32xf32>
    %cst_8 = arith.constant 0.000000e+00 : f32
    %8 = vector.broadcast %cst_8 : f32 to vector<16x32xf32>
    %9 = arith.maximumf %7, %8 : vector<16x32xf32>
    %c0_9 = arith.constant 0 : index
    %c0_10 = arith.constant 0 : index
    %10 = vector.load %arg4[%c0_9, %c0_10] : memref<32x32xf32, #tpu.memory_space<vmem>>, vector<32x32xf32>
    %cst_11 = arith.constant dense<0.000000e+00> : vector<16x32xf32>
    %11 = tpu.matmul %9, %10, %cst_11 {dimension_numbers = #tpu.dot_dimension_numbers<[1], [0], [0], [1], [0, 0, 1, 1], [], []>} : vector<16x32xf32>, vector<32x32xf32>, vector<16x32xf32> -> vector<16x32xf32>
    %cst_12 = arith.constant dense<0.000000e+00> : vector<16x32xf32>
    %12 = tpu.matmul %0, %11, %cst_12 {dimension_numbers = #tpu.dot_dimension_numbers<[1], [0], [0], [1], [0, 0, 1, 1], [], []>} : vector<16x16xf32>, vector<16x32xf32>, vector<16x32xf32> -> vector<16x32xf32>
    %c0_13 = arith.constant 0 : index
    %c0_14 = arith.constant 0 : index
    %13 = vector.load %arg5[%c0_13, %c0_14] : memref<1x32xf32, #tpu.memory_space<vmem>>, vector<1x32xf32>
    %14 = vector.broadcast %13 : vector<1x32xf32> to vector<16x32xf32>
    %15 = arith.addf %12, %14 : vector<16x32xf32>
    %cst_15 = arith.constant 0.000000e+00 : f32
    %16 = vector.broadcast %cst_15 : f32 to vector<16x32xf32>
    %17 = arith.maximumf %15, %16 : vector<16x32xf32>
    %c0_16 = arith.constant 0 : index
    %c0_17 = arith.constant 0 : index
    %18 = vector.load %arg6[%c0_16, %c0_17] : memref<32x128xf32, #tpu.memory_space<vmem>>, vector<32x128xf32>
    %cst_18 = arith.constant dense<0.000000e+00> : vector<16x128xf32>
    %19 = tpu.matmul %17, %18, %cst_18 {dimension_numbers = #tpu.dot_dimension_numbers<[1], [0], [0], [1], [0, 0, 1, 1], [], []>} : vector<16x32xf32>, vector<32x128xf32>, vector<16x128xf32> -> vector<16x128xf32>
    %c0_19 = arith.constant 0 : index
    %c0_20 = arith.constant 0 : index
    %20 = vector.load %arg7[%c0_19, %c0_20] : memref<1x128xf32, #tpu.memory_space<vmem>>, vector<1x128xf32>
    %21 = vector.broadcast %20 : vector<1x128xf32> to vector<16x128xf32>
    %22 = arith.addf %19, %21 : vector<16x128xf32>
    %cst_21 = arith.constant 0.000000e+00 : f32
    %23 = vector.broadcast %cst_21 : f32 to vector<16x128xf32>
    %24 = arith.maximumf %22, %23 : vector<16x128xf32>
    %25 = vector.shape_cast %24 : vector<16x128xf32> to vector<2x8x128xf32>
    %cst_22 = arith.constant dense<0.000000e+00> : vector<2x128xf32>
    %26 = vector.multi_reduction <add>, %25, %cst_22 [1] : vector<2x8x128xf32> to vector<2x128xf32>
    %cst_23 = arith.constant 1.250000e-01 : f32
    %27 = vector.broadcast %cst_23 : f32 to vector<2x128xf32>
    %28 = arith.mulf %26, %27 : vector<2x128xf32>
    %c0_24 = arith.constant 0 : index
    %c0_25 = arith.constant 0 : index
    %29 = vector.load %arg8[%c0_24, %c0_25] : memref<2x128xf32, #tpu.memory_space<vmem>>, vector<2x128xf32>
    tpu.vector_store %arg8[%c0_24, %c0_25], %28 {strides = array<i32>} : memref<2x128xf32, #tpu.memory_space<vmem>>, vector<2x128xf32>,
    return
  }
}

</mosaic_0001>

<llo_original>
// kernel: vanilla_gnn_forward.1
$region0: #{vanilla_gnn_forward.1}
  #allocation0 [shape = 'u32[]', space=smem, size = 0x4, offset = 0x4, fixed_abs, tag = 'smem constant byte address 0x4 - core index']
  #allocation1 [shape = 'u32[144,128]{1,0:T(1,128)}', space=vmem, size = 0x12000, scoped, tag = 'internal scratch']
  %s0 = inlined_call_operand.vmem [shape: f32[16,4], index: 0, kind: input, shape index: {}]
  %s1 = inlined_call_operand.vmem [shape: f32[16,16], index: 1, kind: input, shape index: {}]
  %s2 = inlined_call_operand.vmem [shape: f32[4,32], index: 2, kind: input, shape index: {}]
  %s3 = inlined_call_operand.vmem [shape: f32[1,32], index: 3, kind: input, shape index: {}]
  %s4 = inlined_call_operand.vmem [shape: f32[32,32], index: 4, kind: input, shape index: {}]
  %s5 = inlined_call_operand.vmem [shape: f32[1,32], index: 5, kind: input, shape index: {}]
  %s6 = inlined_call_operand.vmem [shape: f32[32,128], index: 6, kind: input, shape index: {}]
  %s7 = inlined_call_operand.vmem [shape: f32[1,128], index: 7, kind: input, shape index: {}]
  %s8 = inlined_call_operand.vmem [shape: f32[2,128], index: 8, kind: output, shape index: {}]
  %s9 = sld [smem:[#allocation0]]
  $region42: #{vanilla_gnn_forward.1} parent=0
    _
  %s11 = ssub.s32 1, %s9
  %s12 = scalar_select 0, %s11, %s9
  // Predicated region
  $region2: #{vanilla_gnn_forward.1} parent=0 // pred_check
    _
  $region3: #{vanilla_gnn_forward.1} parent=0 // pred_check_branch
    %14 = sbr.rel (0) target = $region5
  $region4: #{vanilla_gnn_forward.1} parent=0 // pred_region
    _
  $region5: #{vanilla_gnn_forward.1} parent=0 // pred_fallthru
    _
  // Predicated region
  $region6: #{vanilla_gnn_forward.1} parent=0 // pred_check
    _
  $region7: #{vanilla_gnn_forward.1} parent=0 // pred_check_branch
    %16 = sbr.rel (0) target = $region9
  $region8: #{vanilla_gnn_forward.1} parent=0 // pred_region
    _
  $region9: #{vanilla_gnn_forward.1} parent=0 // pred_fallthru
    _
  // Predicated region
  $region10: #{vanilla_gnn_forward.1} parent=0 // pred_check
    _
  $region11: #{vanilla_gnn_forward.1} parent=0 // pred_check_branch
    %18 = sbr.rel (0) target = $region13
  $region12: #{vanilla_gnn_forward.1} parent=0 // pred_region
    _
  $region13: #{vanilla_gnn_forward.1} parent=0 // pred_fallthru
    _
  // Predicated region
  $region14: #{vanilla_gnn_forward.1} parent=0 // pred_check
    _
  $region15: #{vanilla_gnn_forward.1} parent=0 // pred_check_branch
    %20 = sbr.rel (0) target = $region17
  $region16: #{vanilla_gnn_forward.1} parent=0 // pred_region
    _
  $region17: #{vanilla_gnn_forward.1} parent=0 // pred_fallthru
    _
  // Predicated region
  $region18: #{vanilla_gnn_forward.1} parent=0 // pred_check
    _
  $region19: #{vanilla_gnn_forward.1} parent=0 // pred_check_branch
    %22 = sbr.rel (0) target = $region21
  $region20: #{vanilla_gnn_forward.1} parent=0 // pred_region
    _
  $region21: #{vanilla_gnn_forward.1} parent=0 // pred_fallthru
    _
  // Predicated region
  $region22: #{vanilla_gnn_forward.1} parent=0 // pred_check
    _
  $region23: #{vanilla_gnn_forward.1} parent=0 // pred_check_branch
    %24 = sbr.rel (0) target = $region25
  $region24: #{vanilla_gnn_forward.1} parent=0 // pred_region
    _
  $region25: #{vanilla_gnn_forward.1} parent=0 // pred_fallthru
    _
  // Predicated region
  $region26: #{vanilla_gnn_forward.1} parent=0 // pred_check
    _
  $region27: #{vanilla_gnn_forward.1} parent=0 // pred_check_branch
    %26 = sbr.rel (0) target = $region29
  $region28: #{vanilla_gnn_forward.1} parent=0 // pred_region
    _
  $region29: #{vanilla_gnn_forward.1} parent=0 // pred_fallthru
    _
  // Predicated region
  $region30: #{vanilla_gnn_forward.1} parent=0 // pred_check
    _
  $region31: #{vanilla_gnn_forward.1} parent=0 // pred_check_branch
    %28 = sbr.rel (0) target = $region33
  $region32: #{vanilla_gnn_forward.1} parent=0 // pred_region
    _
  $region33: #{vanilla_gnn_forward.1} parent=0 // pred_fallthru
    _
  %v29 = vld [vmem:[%s1] sm:$0xff]
  %v30 = vld [vmem:[%s1 + $0x8] sm:$0xff]
  %v31 = vld [vmem:[%s0] sm:$0xff]
  %v32 = vld [vmem:[%s0 + $0x8] sm:$0xff]
  %vm33 = vcmask 130048
  %v35 = vsel %vm33, %v29, 0
  %v38 = vsel %vm33, %v30, 0
  %40 = vmatprep.subr.mxu0 0.0
  %41 = vmatpush1.msra.mxu0 %v31
  %42 = vmatprep.subr.mxu0 0.0
  %43 = vmatpush1.msra.mxu0 %v32
  %44 = vmatprep.subr.mxu0 0.0
  %45 = vmatpush1.msra.mxu0 0.0
  %46 = vmatprep.subr.mxu0 0.0
  %47 = vmatpush1.msra.mxu0 0.0
  %48 = vmatprep.subr.mxu0 0.0
  %49 = vmatpush1.msra.mxu0 0.0
  %50 = vmatprep.subr.mxu0 0.0
  %51 = vmatpush1.msra.mxu0 0.0
  %52 = vmatprep.subr.mxu0 0.0
  %53 = vmatpush1.msra.mxu0 0.0
  %54 = vmatprep.subr.mxu0 0.0
  %55 = vmatpush1.msra.mxu0 0.0
  %56 = vmatprep.subr.mxu0 0.0
  %57 = vmatpush1.msra.mxu0 0.0
  %58 = vmatprep.subr.mxu0 0.0
  %59 = vmatpush1.msra.mxu0 0.0
  %60 = vmatprep.subr.mxu0 0.0
  %61 = vmatpush1.msra.mxu0 0.0
  %62 = vmatprep.subr.mxu0 0.0
  %63 = vmatpush1.msra.mxu0 0.0
  %64 = vmatprep.subr.mxu0 0.0
  %65 = vmatpush1.msra.mxu0 0.0
  %66 = vmatprep.subr.mxu0 0.0
  %67 = vmatpush1.msra.mxu0 0.0
  %68 = vmatprep.subr.mxu0 0.0
  %69 = vmatpush1.msra.mxu0 0.0
  %70 = vmatprep.subr.mxu0 0.0
  %71 = vmatpush1.msra.mxu0 0.0
  %72 = vmatprep.subr.mxu0 0.0
  %73 = vmatpush1.msra.mxu0 0.0
  %74 = vmatprep.subr.mxu0 0.0
  %75 = vmatpush1.msra.mxu0 0.0
  %76 = vmatprep.subr.mxu0 0.0
  %77 = vmatpush1.msra.mxu0 0.0
  %78 = vmatprep.subr.mxu0 0.0
  %79 = vmatpush1.msra.mxu0 0.0
  %80 = vmatprep.subr.mxu0 0.0
  %81 = vmatpush1.msra.mxu0 0.0
  %82 = vmatprep.subr.mxu0 0.0
  %83 = vmatpush1.msra.mxu0 0.0
  %84 = vmatprep.subr.mxu0 0.0
  %85 = vmatpush1.msra.mxu0 0.0
  %86 = vmatprep.subr.mxu0 0.0
  %87 = vmatpush1.msra.mxu0 0.0
  %88 = vmatprep.subr.mxu0 0.0
  %89 = vmatpush1.msra.mxu0 0.0
  %90 = vmatprep.subr.mxu0 0.0
  %91 = vmatpush1.msra.mxu0 0.0
  %92 = vmatprep.subr.mxu0 0.0
  %93 = vmatpush1.msra.mxu0 0.0
  %94 = vmatprep.subr.mxu0 0.0
  %95 = vmatpush1.msra.mxu0 0.0
  %96 = vmatprep.subr.mxu0 0.0
  %97 = vmatpush1.msra.mxu0 0.0
  %98 = vmatprep.subr.mxu0 0.0
  %99 = vmatpush1.msra.mxu0 0.0
  %100 = vmatprep.subr.mxu0 0.0
  %101 = vmatpush1.msra.mxu0 0.0
  %102 = vmatprep.subr.mxu0 0.0
  %103 = vmatpush1.msra.mxu0 0.0
  %104 = vmatprep.mubr.f32.mxu0 0.0
  %105 = vmatmul.mubr.f32.gmra.mrb[0].mxu0 %v35
  %v106 = vpop.f32.mrb[0].mxu0
  %v107 = vadd.f32 0.0, %v106
  %v108 = vpop.f32.mrb[0].mxu0
  %109 = vmatprep.mubr.f32.mxu0 0.0
  %110 = vmatmul.mubr.f32.gmra.mrb[0].mxu0 %v38
  %v111 = vpop.f32.mrb[0].mxu0
  %v112 = vadd.f32 0.0, %v111
  %v113 = vpop.f32.mrb[0].mxu0
  %114 = vdwg.mxu0
  %v115 = vld [vmem:[%s2] sm:$0xf]
  %v116 = vld [vmem:[%s3] sm:$0x1]
  %v118 = vlaneseq
  %v119 = vshrl.u32 %v118, 7
  %v120 = vsub.s32 0, %v119
  %v121 = vrot.slane %v116, %v120
  %vm123 = vcmask 31744
  %v125 = vsel %vm123, %v107, 0
  %v128 = vsel %vm123, %v112, 0
  %vm130 = vcmask 1043456
  %v132 = vsel %vm130, %v115, 0
  %134 = vmatprep.subr.mxu0 0.0
  %135 = vmatpush1.msra.mxu0 %v132
  %136 = vmatprep.subr.mxu0 0.0
  %137 = vmatpush1.msra.mxu0 0.0
  %138 = vmatprep.subr.mxu0 0.0
  %139 = vmatpush1.msra.mxu0 0.0
  %140 = vmatprep.subr.mxu0 0.0
  %141 = vmatpush1.msra.mxu0 0.0
  %142 = vmatprep.subr.mxu0 0.0
  %143 = vmatpush1.msra.mxu0 0.0
  %144 = vmatprep.subr.mxu0 0.0
  %145 = vmatpush1.msra.mxu0 0.0
  %146 = vmatprep.subr.mxu0 0.0
  %147 = vmatpush1.msra.mxu0 0.0
  %148 = vmatprep.subr.mxu0 0.0
  %149 = vmatpush1.msra.mxu0 0.0
  %150 = vmatprep.subr.mxu0 0.0
  %151 = vmatpush1.msra.mxu0 0.0
  %152 = vmatprep.subr.mxu0 0.0
  %153 = vmatpush1.msra.mxu0 0.0
  %154 = vmatprep.subr.mxu0 0.0
  %155 = vmatpush1.msra.mxu0 0.0
  %156 = vmatprep.subr.mxu0 0.0
  %157 = vmatpush1.msra.mxu0 0.0
  %158 = vmatprep.subr.mxu0 0.0
  %159 = vmatpush1.msra.mxu0 0.0
  %160 = vmatprep.subr.mxu0 0.0
  %161 = vmatpush1.msra.mxu0 0.0
  %162 = vmatprep.subr.mxu0 0.0
  %163 = vmatpush1.msra.mxu0 0.0
  %164 = vmatprep.subr.mxu0 0.0
  %165 = vmatpush1.msra.mxu0 0.0
  %166 = vmatprep.subr.mxu0 0.0
  %167 = vmatpush1.msra.mxu0 0.0
  %168 = vmatprep.subr.mxu0 0.0
  %169 = vmatpush1.msra.mxu0 0.0
  %170 = vmatprep.subr.mxu0 0.0
  %171 = vmatpush1.msra.mxu0 0.0
  %172 = vmatprep.subr.mxu0 0.0
  %173 = vmatpush1.msra.mxu0 0.0
  %174 = vmatprep.subr.mxu0 0.0
  %175 = vmatpush1.msra.mxu0 0.0
  %176 = vmatprep.subr.mxu0 0.0
  %177 = vmatpush1.msra.mxu0 0.0
  %178 = vmatprep.subr.mxu0 0.0
  %179 = vmatpush1.msra.mxu0 0.0
  %180 = vmatprep.subr.mxu0 0.0
  %181 = vmatpush1.msra.mxu0 0.0
  %182 = vmatprep.subr.mxu0 0.0
  %183 = vmatpush1.msra.mxu0 0.0
  %184 = vmatprep.subr.mxu0 0.0
  %185 = vmatpush1.msra.mxu0 0.0
  %186 = vmatprep.subr.mxu0 0.0
  %187 = vmatpush1.msra.mxu0 0.0
  %188 = vmatprep.subr.mxu0 0.0
  %189 = vmatpush1.msra.mxu0 0.0
  %190 = vmatprep.subr.mxu0 0.0
  %191 = vmatpush1.msra.mxu0 0.0
  %192 = vmatprep.subr.mxu0 0.0
  %193 = vmatpush1.msra.mxu0 0.0
  %194 = vmatprep.subr.mxu0 0.0
  %195 = vmatpush1.msra.mxu0 0.0
  %196 = vmatprep.subr.mxu0 0.0
  %197 = vmatpush1.msra.mxu0 0.0
  %198 = vmatprep.mubr.f32.mxu0 0.0
  %199 = vmatmul.mubr.f32.gmra.mrb[0].mxu0 %v125
  %v200 = vpop.f32.mrb[0].mxu0
  %v201 = vadd.f32 %v121, %v200
  %v202 = vpop.f32.mrb[0].mxu0
  %203 = vmatprep.mubr.f32.mxu0 0.0
  %204 = vmatmul.mubr.f32.gmra.mrb[0].mxu0 %v128
  %v205 = vpop.f32.mrb[0].mxu0
  %v206 = vadd.f32 %v121, %v205
  %v207 = vpop.f32.mrb[0].mxu0
  %208 = vdwg.mxu0
  %v209 = vmax.f32 %v201, 0.0
  %v210 = vmax.f32 %v206, 0.0
  %v211 = vld [vmem:[%s4] sm:$0xff]
  %v212 = vld [vmem:[%s4 + $0x8] sm:$0xff]
  %v213 = vld [vmem:[%s4 + $0x10] sm:$0xff]
  %v214 = vld [vmem:[%s4 + $0x18] sm:$0xff]
  %vm215 = vcmask 261120
  %v217 = vsel %vm215, %v209, 0
  %v220 = vsel %vm215, %v210, 0
  %222 = vmatprep.subr.mxu0 0.0
  %223 = vmatpush1.msra.mxu0 %v211
  %224 = vmatprep.subr.mxu0 0.0
  %225 = vmatpush1.msra.mxu0 %v212
  %226 = vmatprep.subr.mxu0 0.0
  %227 = vmatpush1.msra.mxu0 %v213
  %228 = vmatprep.subr.mxu0 0.0
  %229 = vmatpush1.msra.mxu0 %v214
  %230 = vmatprep.subr.mxu0 0.0
  %231 = vmatpush1.msra.mxu0 0.0
  %232 = vmatprep.subr.mxu0 0.0
  %233 = vmatpush1.msra.mxu0 0.0
  %234 = vmatprep.subr.mxu0 0.0
  %235 = vmatpush1.msra.mxu0 0.0
  %236 = vmatprep.subr.mxu0 0.0
  %237 = vmatpush1.msra.mxu0 0.0
  %238 = vmatprep.subr.mxu0 0.0
  %239 = vmatpush1.msra.mxu0 0.0
  %240 = vmatprep.subr.mxu0 0.0
  %241 = vmatpush1.msra.mxu0 0.0
  %242 = vmatprep.subr.mxu0 0.0
  %243 = vmatpush1.msra.mxu0 0.0
  %244 = vmatprep.subr.mxu0 0.0
  %245 = vmatpush1.msra.mxu0 0.0
  %246 = vmatprep.subr.mxu0 0.0
  %247 = vmatpush1.msra.mxu0 0.0
  %248 = vmatprep.subr.mxu0 0.0
  %249 = vmatpush1.msra.mxu0 0.0
  %250 = vmatprep.subr.mxu0 0.0
  %251 = vmatpush1.msra.mxu0 0.0
  %252 = vmatprep.subr.mxu0 0.0
  %253 = vmatpush1.msra.mxu0 0.0
  %254 = vmatprep.subr.mxu0 0.0
  %255 = vmatpush1.msra.mxu0 0.0
  %256 = vmatprep.subr.mxu0 0.0
  %257 = vmatpush1.msra.mxu0 0.0
  %258 = vmatprep.subr.mxu0 0.0
  %259 = vmatpush1.msra.mxu0 0.0
  %260 = vmatprep.subr.mxu0 0.0
  %261 = vmatpush1.msra.mxu0 0.0
  %262 = vmatprep.subr.mxu0 0.0
  %263 = vmatpush1.msra.mxu0 0.0
  %264 = vmatprep.subr.mxu0 0.0
  %265 = vmatpush1.msra.mxu0 0.0
  %266 = vmatprep.subr.mxu0 0.0
  %267 = vmatpush1.msra.mxu0 0.0
  %268 = vmatprep.subr.mxu0 0.0
  %269 = vmatpush1.msra.mxu0 0.0
  %270 = vmatprep.subr.mxu0 0.0
  %271 = vmatpush1.msra.mxu0 0.0
  %272 = vmatprep.subr.mxu0 0.0
  %273 = vmatpush1.msra.mxu0 0.0
  %274 = vmatprep.subr.mxu0 0.0
  %275 = vmatpush1.msra.mxu0 0.0
  %276 = vmatprep.subr.mxu0 0.0
  %277 = vmatpush1.msra.mxu0 0.0
  %278 = vmatprep.subr.mxu0 0.0
  %279 = vmatpush1.msra.mxu0 0.0
  %280 = vmatprep.subr.mxu0 0.0
  %281 = vmatpush1.msra.mxu0 0.0
  %282 = vmatprep.subr.mxu0 0.0
  %283 = vmatpush1.msra.mxu0 0.0
  %284 = vmatprep.subr.mxu0 0.0
  %285 = vmatpush1.msra.mxu0 0.0
  %286 = vmatprep.mubr.f32.mxu0 0.0
  %287 = vmatmul.mubr.f32.gmra.mrb[0].mxu0 %v217
  %v288 = vpop.f32.mrb[0].mxu0
  %v289 = vadd.f32 0.0, %v288
  %v290 = vpop.f32.mrb[0].mxu0
  %291 = vmatprep.mubr.f32.mxu0 0.0
  %292 = vmatmul.mubr.f32.gmra.mrb[0].mxu0 %v220
  %v293 = vpop.f32.mrb[0].mxu0
  %v294 = vadd.f32 0.0, %v293
  %v295 = vpop.f32.mrb[0].mxu0
  %296 = vdwg.mxu0
  %v297 = vld [vmem:[%s5] sm:$0x1]
  %v299 = vlaneseq
  %v300 = vshrl.u32 %v299, 7
  %v301 = vsub.s32 0, %v300
  %v302 = vrot.slane %v297, %v301
  %304 = vmatprep.subr.mxu0 0.0
  %305 = vmatpush1.msra.mxu0 %v289
  %306 = vmatprep.subr.mxu0 0.0
  %307 = vmatpush1.msra.mxu0 %v294
  %308 = vmatprep.subr.mxu0 0.0
  %309 = vmatpush1.msra.mxu0 0.0
  %310 = vmatprep.subr.mxu0 0.0
  %311 = vmatpush1.msra.mxu0 0.0
  %312 = vmatprep.subr.mxu0 0.0
  %313 = vmatpush1.msra.mxu0 0.0
  %314 = vmatprep.subr.mxu0 0.0
  %315 = vmatpush1.msra.mxu0 0.0
  %316 = vmatprep.subr.mxu0 0.0
  %317 = vmatpush1.msra.mxu0 0.0
  %318 = vmatprep.subr.mxu0 0.0
  %319 = vmatpush1.msra.mxu0 0.0
  %320 = vmatprep.subr.mxu0 0.0
  %321 = vmatpush1.msra.mxu0 0.0
  %322 = vmatprep.subr.mxu0 0.0
  %323 = vmatpush1.msra.mxu0 0.0
  %324 = vmatprep.subr.mxu0 0.0
  %325 = vmatpush1.msra.mxu0 0.0
  %326 = vmatprep.subr.mxu0 0.0
  %327 = vmatpush1.msra.mxu0 0.0
  %328 = vmatprep.subr.mxu0 0.0
  %329 = vmatpush1.msra.mxu0 0.0
  %330 = vmatprep.subr.mxu0 0.0
  %331 = vmatpush1.msra.mxu0 0.0
  %332 = vmatprep.subr.mxu0 0.0
  %333 = vmatpush1.msra.mxu0 0.0
  %334 = vmatprep.subr.mxu0 0.0
  %335 = vmatpush1.msra.mxu0 0.0
  %336 = vmatprep.subr.mxu0 0.0
  %337 = vmatpush1.msra.mxu0 0.0
  %338 = vmatprep.subr.mxu0 0.0
  %339 = vmatpush1.msra.mxu0 0.0
  %340 = vmatprep.subr.mxu0 0.0
  %341 = vmatpush1.msra.mxu0 0.0
  %342 = vmatprep.subr.mxu0 0.0
  %343 = vmatpush1.msra.mxu0 0.0
  %344 = vmatprep.subr.mxu0 0.0
  %345 = vmatpush1.msra.mxu0 0.0
  %346 = vmatprep.subr.mxu0 0.0
  %347 = vmatpush1.msra.mxu0 0.0
  %348 = vmatprep.subr.mxu0 0.0
  %349 = vmatpush1.msra.mxu0 0.0
  %350 = vmatprep.subr.mxu0 0.0
  %351 = vmatpush1.msra.mxu0 0.0
  %352 = vmatprep.subr.mxu0 0.0
  %353 = vmatpush1.msra.mxu0 0.0
  %354 = vmatprep.subr.mxu0 0.0
  %355 = vmatpush1.msra.mxu0 0.0
  %356 = vmatprep.subr.mxu0 0.0
  %357 = vmatpush1.msra.mxu0 0.0
  %358 = vmatprep.subr.mxu0 0.0
  %359 = vmatpush1.msra.mxu0 0.0
  %360 = vmatprep.subr.mxu0 0.0
  %361 = vmatpush1.msra.mxu0 0.0
  %362 = vmatprep.subr.mxu0 0.0
  %363 = vmatpush1.msra.mxu0 0.0
  %364 = vmatprep.subr.mxu0 0.0
  %365 = vmatpush1.msra.mxu0 0.0
  %366 = vmatprep.subr.mxu0 0.0
  %367 = vmatpush1.msra.mxu0 0.0
  %368 = vmatprep.mubr.f32.mxu0 0.0
  %369 = vmatmul.mubr.f32.gmra.mrb[0].mxu0 %v35
  %v370 = vpop.f32.mrb[0].mxu0
  %v371 = vadd.f32 %v302, %v370
  %v372 = vpop.f32.mrb[0].mxu0
  %373 = vmatprep.mubr.f32.mxu0 0.0
  %374 = vmatmul.mubr.f32.gmra.mrb[0].mxu0 %v38
  %v375 = vpop.f32.mrb[0].mxu0
  %v376 = vadd.f32 %v302, %v375
  %v377 = vpop.f32.mrb[0].mxu0
  %378 = vdwg.mxu0
  %v379 = vmax.f32 %v371, 0.0
  %v380 = vmax.f32 %v376, 0.0
  %v381 = vld [vmem:[%s6] sm:$0xff]
  %v382 = vld [vmem:[%s6 + $0x8] sm:$0xff]
  %v383 = vld [vmem:[%s6 + $0x10] sm:$0xff]
  %v384 = vld [vmem:[%s6 + $0x18] sm:$0xff]
  %v385 = vld [vmem:[%s7] sm:$0x1]
  %v387 = vlaneseq
  %v388 = vshrl.u32 %v387, 7
  %v389 = vsub.s32 0, %v388
  %v390 = vrot.slane %v385, %v389
  %v393 = vsel %vm215, %v379, 0
  %v396 = vsel %vm215, %v380, 0
  %398 = vmatprep.subr.mxu0 0.0
  %399 = vmatpush1.msra.mxu0 %v381
  %400 = vmatprep.subr.mxu0 0.0
  %401 = vmatpush1.msra.mxu0 %v382
  %402 = vmatprep.subr.mxu0 0.0
  %403 = vmatpush1.msra.mxu0 %v383
  %404 = vmatprep.subr.mxu0 0.0
  %405 = vmatpush1.msra.mxu0 %v384
  %406 = vmatprep.subr.mxu0 0.0
  %407 = vmatpush1.msra.mxu0 0.0
  %408 = vmatprep.subr.mxu0 0.0
  %409 = vmatpush1.msra.mxu0 0.0
  %410 = vmatprep.subr.mxu0 0.0
  %411 = vmatpush1.msra.mxu0 0.0
  %412 = vmatprep.subr.mxu0 0.0
  %413 = vmatpush1.msra.mxu0 0.0
  %414 = vmatprep.subr.mxu0 0.0
  %415 = vmatpush1.msra.mxu0 0.0
  %416 = vmatprep.subr.mxu0 0.0
  %417 = vmatpush1.msra.mxu0 0.0
  %418 = vmatprep.subr.mxu0 0.0
  %419 = vmatpush1.msra.mxu0 0.0
  %420 = vmatprep.subr.mxu0 0.0
  %421 = vmatpush1.msra.mxu0 0.0
  %422 = vmatprep.subr.mxu0 0.0
  %423 = vmatpush1.msra.mxu0 0.0
  %424 = vmatprep.subr.mxu0 0.0
  %425 = vmatpush1.msra.mxu0 0.0
  %426 = vmatprep.subr.mxu0 0.0
  %427 = vmatpush1.msra.mxu0 0.0
  %428 = vmatprep.subr.mxu0 0.0
  %429 = vmatpush1.msra.mxu0 0.0
  %430 = vmatprep.subr.mxu0 0.0
  %431 = vmatpush1.msra.mxu0 0.0
  %432 = vmatprep.subr.mxu0 0.0
  %433 = vmatpush1.msra.mxu0 0.0
  %434 = vmatprep.subr.mxu0 0.0
  %435 = vmatpush1.msra.mxu0 0.0
  %436 = vmatprep.subr.mxu0 0.0
  %437 = vmatpush1.msra.mxu0 0.0
  %438 = vmatprep.subr.mxu0 0.0
  %439 = vmatpush1.msra.mxu0 0.0
  %440 = vmatprep.subr.mxu0 0.0
  %441 = vmatpush1.msra.mxu0 0.0
  %442 = vmatprep.subr.mxu0 0.0
  %443 = vmatpush1.msra.mxu0 0.0
  %444 = vmatprep.subr.mxu0 0.0
  %445 = vmatpush1.msra.mxu0 0.0
  %446 = vmatprep.subr.mxu0 0.0
  %447 = vmatpush1.msra.mxu0 0.0
  %448 = vmatprep.subr.mxu0 0.0
  %449 = vmatpush1.msra.mxu0 0.0
  %450 = vmatprep.subr.mxu0 0.0
  %451 = vmatpush1.msra.mxu0 0.0
  %452 = vmatprep.subr.mxu0 0.0
  %453 = vmatpush1.msra.mxu0 0.0
  %454 = vmatprep.subr.mxu0 0.0
  %455 = vmatpush1.msra.mxu0 0.0
  %456 = vmatprep.subr.mxu0 0.0
  %457 = vmatpush1.msra.mxu0 0.0
  %458 = vmatprep.subr.mxu0 0.0
  %459 = vmatpush1.msra.mxu0 0.0
  %460 = vmatprep.subr.mxu0 0.0
  %461 = vmatpush1.msra.mxu0 0.0
  %462 = vmatprep.mubr.f32.mxu0 0.0
  %463 = vmatmul.mubr.f32.gmra.mrb[0].mxu0 %v393
  %v464 = vpop.f32.mrb[0].mxu0
  %v465 = vadd.f32 %v390, %v464
  %v466 = vpop.f32.mrb[0].mxu0
  %467 = vmatprep.mubr.f32.mxu0 0.0
  %468 = vmatmul.mubr.f32.gmra.mrb[0].mxu0 %v396
  %v469 = vpop.f32.mrb[0].mxu0
  %v470 = vadd.f32 %v390, %v469
  %v471 = vpop.f32.mrb[0].mxu0
  %472 = vdwg.mxu0
  %v473 = vmax.f32 %v465, 0.0
  %v474 = vmax.f32 %v470, 0.0
  %v475 = vrot.slane %v473, 4
  %v476 = vadd.f32 %v473, %v475
  %v477 = vrot.slane %v476, 2
  %v478 = vadd.f32 %v476, %v477
  %v479 = vrot.slane %v478, 1
  %v480 = vadd.f32 %v478, %v479
  %v481 = vrot.slane %v474, 4
  %v482 = vadd.f32 %v474, %v481
  %v483 = vrot.slane %v482, 2
  %v484 = vadd.f32 %v482, %v483
  %v485 = vrot.slane %v484, 1
  %v486 = vadd.f32 %v484, %v485
  %v487 = vmul.f32 %v480, 0.125
  %v488 = vmul.f32 %v486, 0.125
  %vm491 = vcmask 1041409
  %v492 = vsel %vm491, %v488, %v487
  %494 = vst [vmem:[%s8] sm:$0x3] %v492
  // Predicated region
  $region34: #{vanilla_gnn_forward.1} parent=0 // pred_check
    _
  $region35: #{vanilla_gnn_forward.1} parent=0 // pred_check_branch
    %496 = sbr.rel (0) target = $region37
  $region36: #{vanilla_gnn_forward.1} parent=0 // pred_region
    _
  $region37: #{vanilla_gnn_forward.1} parent=0 // pred_fallthru
    _
  // Predicated region
  $region38: #{vanilla_gnn_forward.1} parent=0 // pred_check
    _
  $region39: #{vanilla_gnn_forward.1} parent=0 // pred_check_branch
    %498 = sbr.rel (0) target = $region41
  $region40: #{vanilla_gnn_forward.1} parent=0 // pred_region
    _
  $region41: #{vanilla_gnn_forward.1} parent=0 // pred_fallthru
    _

</llo_original>
